<compile_context>
chip_gen: v5e
topology: v5e:2x2
jax: 0.10.0
libtpu: 0.0.40
codegen_flags: <defaults>
</compile_context>

<pallas_src>
import functools

import jax
import jax.numpy as jnp
from jax import lax
from jax.experimental import pallas as pl
from jax.experimental.pallas import tpu as pltpu

_BN_EPS = 1e-5
_LANES = 128
_MXU_DTYPE = jnp.bfloat16   # MXU operand dtype (accumulation stays f32 on all gens)
_ACT_DTYPE = jnp.bfloat16   # storage dtype of the intermediate lane-dense activations


def _round_up(x, m):
    return (x + m - 1) // m * m


# -----------------------------------------------------------------------------
# Single pass: im2col GEMM (bf16 in, f32 acc) + bias + ReLU, writes the lane-dense
# activation tile plus a 2-row per-tile per-channel [sum, sum-of-squares] partial.
# -----------------------------------------------------------------------------
def _conv_relu_stats_kernel(a_ref, w_ref, b_ref, y_ref, stats_ref, *, tile_m, m_real):
    # One GEMM on the MXU per tile, f32 accumulation.
    y = jnp.dot(a_ref[...], w_ref[...], preferred_element_type=jnp.float32)
    y = jnp.maximum(y + b_ref[...], 0.0)                       # bias + ReLU (f32 VPU)

    # Rows in the padded tail of M must not pollute the BN statistics.
    row = pl.program_id(0) * tile_m + lax.broadcasted_iota(jnp.int32, (tile_m, 1), 0)
    y = jnp.where(row < m_real, y, 0.0)

    y_ref[...] = y.astype(y_ref.dtype)                         # lane-dense bf16 store

    s = jnp.sum(y, axis=0, keepdims=True)                      # per-channel sum       (1, 128)
    ss = jnp.sum(y * y, axis=0, keepdims=True)                 # per-channel sum of sq (1, 128)
    stats_ref[...] = jnp.concatenate([s, ss], axis=0)[None]    # (1, 2, 128)


def conv_block_param_forward(x_nchw, w_oihw, bias, gamma, beta, *, tile_m=512):
    """Forward pass matching ConvBlockParam.forward (NCHW in, NCHW out, train-mode BN)."""
    x = jnp.transpose(x_nchw, (0, 2, 3, 1)).astype(jnp.float32)   # NHWC
    n, h, w_sp, cin = x.shape
    cout = w_oihw.shape[0]
    oh, ow = h - 2, w_sp - 2
    m = n * oh * ow
    k = 9 * cin
    cout_p = _round_up(cout, _LANES)

    # ---- tile sizing: multiples of 16 (bf16 sublane packing); keep >=2 grid steps
    #      when possible so v7x's two TensorCores both get work on the "parallel" axis.
    tile_m = min(int(tile_m), 1024, _round_up(m, 16))
    tile_m = max(16, _round_up(tile_m, 16))
    if _round_up(m, tile_m) // tile_m < 2 and m > 16:
        tile_m = max(16, _round_up((m + 1) // 2, 16))
    m_p = _round_up(m, tile_m)
    grid_m = m_p // tile_m

    # ---- im2col (XLA): rows m=(n,oh,ow), cols k=(kh,kw,cin); pad M to the tile grid.
    taps = [x[:, kh:kh + oh, kw:kw + ow, :] for kh in range(3) for kw in range(3)]
    a = jnp.concatenate(taps, axis=-1).reshape(m, k)
    a = jnp.pad(a, ((0, m_p - m), (0, 0))).astype(_MXU_DTYPE)

    # ---- weight OIHW -> (9*Cin, Cout) with matching k order; pad Cout -> 128 lanes.
    w2 = jnp.transpose(w_oihw, (2, 3, 1, 0)).astype(jnp.float32).reshape(k, cout)
    w2 = jnp.pad(w2, ((0, 0), (0, cout_p - cout))).astype(_MXU_DTYPE)
    b2 = jnp.pad(bias.astype(jnp.float32).reshape(1, cout), ((0, 0), (0, cout_p - cout)))

    cparams = pltpu.CompilerParams(
        dimension_semantics=("parallel",),
        vmem_limit_bytes=32 * 1024 * 1024,
    )

    kern = functools.partial(_conv_relu_stats_kernel, tile_m=tile_m, m_real=m)
    y_act, stats_partial = pl.pallas_call(
        kern,
        grid=(grid_m,),
        in_specs=[
            pl.BlockSpec((tile_m, k), lambda i: (i, 0)),        # im2col tile (bf16, 36 lanes)
            pl.BlockSpec((k, cout_p), lambda i: (0, 0)),        # weights (resident, bf16)
            pl.BlockSpec((1, cout_p), lambda i: (0, 0)),        # bias (f32)
        ],
        out_specs=[
            pl.BlockSpec((tile_m, cout_p), lambda i: (i, 0)),   # activations (lane-dense bf16)
            pl.BlockSpec((1, 2, cout_p), lambda i: (i, 0, 0)),  # per-tile [sum, sumsq]
        ],
        out_shape=(
            jax.ShapeDtypeStruct((m_p, cout_p), _ACT_DTYPE),
            jax.ShapeDtypeStruct((grid_m, 2, cout_p), jnp.float32),
        ),
        compiler_params=cparams,
    )(a, w2, b2)

    # ---- tiny cross-tile combine (O(Cout) work) + BN scale/shift, train-mode semantics.
    # TODO(synk): for very large activations prefer a subtract-mean second pass;
    # E[x^2]-E[x]^2 in f32 is fine at these magnitudes.
    stats = jnp.sum(stats_partial, axis=0)                      # (2, cout_p)
    mean = stats[0, :cout] / m
    var = stats[1, :cout] / m - mean * mean                     # biased variance (train-mode BN)
    inv = lax.rsqrt(var + _BN_EPS)
    scale = gamma.astype(jnp.float32) * inv                     # (cout,)
    shift = beta.astype(jnp.float32) - mean * scale             # (cout,)

    # ---- fused XLA epilogue: slice the real channels, apply the affine, NCHW transpose.
    y = y_act[:m, :cout].astype(jnp.float32)
    out = y * scale.reshape(1, cout) + shift.reshape(1, cout)
    out = out.reshape(n, oh, ow, cout)
    return jnp.transpose(out, (0, 3, 1, 2))                     # back to NCHW


def _reference_forward(x_nchw, w_oihw, bias, gamma, beta):
    """Pure-JAX f32 reference (sanity check)."""
    y = lax.conv_general_dilated(
        x_nchw.astype(jnp.float32), w_oihw.astype(jnp.float32),
        window_strides=(1, 1), padding="VALID",
        dimension_numbers=("NCHW", "OIHW", "NCHW"))
    y = y + bias.reshape(1, -1, 1, 1)
    y = jnp.maximum(y, 0.0)
    mean = jnp.mean(y, axis=(0, 2, 3), keepdims=True)
    var = jnp.mean((y - mean) ** 2, axis=(0, 2, 3), keepdims=True)
    y = (y - mean) * lax.rsqrt(var + _BN_EPS)
    return y * gamma.reshape(1, -1, 1, 1) + beta.reshape(1, -1, 1, 1)


if __name__ == "__main__":
    key = jax.random.PRNGKey(0)
    k_x, k_w, k_b = jax.random.split(key, 3)

    N, C_IN, C_OUT, HW = 2, 4, 8, 16
    x = jax.random.normal(k_x, (N, C_IN, HW, HW), dtype=jnp.float32)

    # Parameter shapes follow nn.Conv2d(4, 8, 3) + BatchNorm2d(8) (fresh module, train mode).
    fan_in = C_IN * 3 * 3
    bound = 1.0 / (fan_in ** 0.5)
    w = jax.random.uniform(k_w, (C_OUT, C_IN, 3, 3),
                           minval=-bound, maxval=bound, dtype=jnp.float32)
    b = jax.random.uniform(k_b, (C_OUT,),
                           minval=-bound, maxval=bound, dtype=jnp.float32)
    gamma = jnp.ones((C_OUT,), jnp.float32)   # BN default weight
    beta = jnp.zeros((C_OUT,), jnp.float32)   # BN default bias

    # Default tile_m: the >=2-grid-step guard kicks in (M=392 -> 2 tiles, masked tail),
    # exercising the multi-tile / masked-statistics path and the v7x 2-TC split.
    fwd = jax.jit(conv_block_param_forward)
    out = jax.block_until_ready(fwd(x, w, b, gamma, beta))

    ref = _reference_forward(x, w, b, gamma, beta)
    assert out.shape == (N, C_OUT, HW - 2, HW - 2), out.shape
    # 2e-2 tolerance: kernel uses bf16 MXU operands + bf16 intermediate storage
    # (f32 accumulation / statistics), reference is pure f32.
    assert jnp.allclose(out, ref, rtol=2e-2, atol=2e-2), "mismatch vs JAX reference"

    print("KERNEL_OK")
</pallas_src>

<mosaic_0001>
module attributes {stable_mosaic.version = 11 : i64} {
  func.func @_conv_relu_stats_kernel(%arg0: i32, %arg1: memref<208x36xbf16, #tpu.memory_space<vmem>>, %arg2: memref<36x128xbf16, #tpu.memory_space<vmem>>, %arg3: memref<1x128xf32, #tpu.memory_space<vmem>>, %arg4: memref<208x128xbf16, #tpu.memory_space<vmem>>, %arg5: memref<1x2x128xf32, #tpu.memory_space<vmem>>) attributes {dimension_semantics = [#tpu.dimension_semantics<parallel>], iteration_bounds = array<i64: 2>, scalar_prefetch = 0 : i64, scratch_operands = 0 : i64, tpu.core_type = #tpu.core_type<tc>, window_params = [{transform_indices = @transform_0, window_bounds = array<i64: 208, 36>}, {pipeline_mode = #tpu.pipeline_mode<synchronous>, transform_indices = @transform_1, window_bounds = array<i64: 36, 128>}, {pipeline_mode = #tpu.pipeline_mode<synchronous>, transform_indices = @transform_2, window_bounds = array<i64: 1, 128>}, {transform_indices = @transform_3, window_bounds = array<i64: 208, 128>}, {transform_indices = @transform_4, window_bounds = array<i64: 1, 2, 128>}]} {
    %c0 = arith.constant 0 : index
    %c0_0 = arith.constant 0 : index
    %0 = vector.load %arg1[%c0, %c0_0] : memref<208x36xbf16, #tpu.memory_space<vmem>>, vector<208x36xbf16>
    %c0_1 = arith.constant 0 : index
    %c0_2 = arith.constant 0 : index
    %1 = vector.load %arg2[%c0_1, %c0_2] : memref<36x128xbf16, #tpu.memory_space<vmem>>, vector<36x128xbf16>
    %cst = arith.constant dense<0.000000e+00> : vector<208x128xf32>
    %2 = tpu.matmul %0, %1, %cst {dimension_numbers = #tpu.dot_dimension_numbers<[1], [0], [0], [1], [0, 0, 1, 1], [], []>} : vector<208x36xbf16>, vector<36x128xbf16>, vector<208x128xf32> -> vector<208x128xf32>
    %c0_3 = arith.constant 0 : index
    %c0_4 = arith.constant 0 : index
    %3 = vector.load %arg3[%c0_3, %c0_4] : memref<1x128xf32, #tpu.memory_space<vmem>>, vector<1x128xf32>
    %4 = vector.broadcast %3 : vector<1x128xf32> to vector<208x128xf32>
    %5 = arith.addf %2, %4 : vector<208x128xf32>
    %cst_5 = arith.constant 0.000000e+00 : f32
    %6 = vector.broadcast %cst_5 : f32 to vector<208x128xf32>
    %7 = arith.maximumf %5, %6 : vector<208x128xf32>
    %c208_i32 = arith.constant 208 : i32
    %8 = arith.muli %arg0, %c208_i32 : i32
    %9 = tpu.iota {dimensions = array<i32: 0>} : vector<208x1xi32>
    %10 = vector.broadcast %8 : i32 to vector<208x1xi32>
    %11 = arith.addi %10, %9 : vector<208x1xi32>
    %c392_i32 = arith.constant 392 : i32
    %12 = vector.broadcast %c392_i32 : i32 to vector<208x1xi32>
    %13 = arith.cmpi slt, %11, %12 : vector<208x1xi32>
    %cst_6 = arith.constant 0.000000e+00 : f32
    %14 = vector.shape_cast %13 : vector<208x1xi1> to vector<208x1xi1>
    %15 = vector.broadcast %14 : vector<208x1xi1> to vector<208x128xi1>
    %16 = vector.broadcast %cst_6 : f32 to vector<208x128xf32>
    %17 = arith.select %15, %7, %16 : vector<208x128xi1>, vector<208x128xf32>
    %18 = arith.truncf %17 : vector<208x128xf32> to vector<208x128xbf16>
    %c0_7 = arith.constant 0 : index
    %c0_8 = arith.constant 0 : index
    %19 = vector.load %arg4[%c0_7, %c0_8] : memref<208x128xbf16, #tpu.memory_space<vmem>>, vector<208x128xbf16>
    tpu.vector_store %arg4[%c0_7, %c0_8], %18 {strides = array<i32>} : memref<208x128xbf16, #tpu.memory_space<vmem>>, vector<208x128xbf16>,
    %cst_9 = arith.constant dense<0.000000e+00> : vector<128xf32>
    %20 = vector.multi_reduction <add>, %17, %cst_9 [0] : vector<208x128xf32> to vector<128xf32>
    %21 = vector.shape_cast %20 : vector<128xf32> to vector<1x128xf32>
    %22 = arith.mulf %17, %17 : vector<208x128xf32>
    %cst_10 = arith.constant dense<0.000000e+00> : vector<128xf32>
    %23 = vector.multi_reduction <add>, %22, %cst_10 [0] : vector<208x128xf32> to vector<128xf32>
    %24 = vector.shape_cast %23 : vector<128xf32> to vector<1x128xf32>
    %25 = tpu.concatenate %21, %24 in 0 : vector<1x128xf32>, vector<1x128xf32> -> vector<2x128xf32>
    %26 = vector.shape_cast %25 : vector<2x128xf32> to vector<1x2x128xf32>
    %c0_11 = arith.constant 0 : index
    %c0_12 = arith.constant 0 : index
    %c0_13 = arith.constant 0 : index
    %27 = vector.load %arg5[%c0_11, %c0_12, %c0_13] : memref<1x2x128xf32, #tpu.memory_space<vmem>>, vector<1x2x128xf32>
    tpu.vector_store %arg5[%c0_11, %c0_12, %c0_13], %26 {strides = array<i32>} : memref<1x2x128xf32, #tpu.memory_space<vmem>>, vector<1x2x128xf32>,
    return
  }
  func.func @transform_0(%arg0: i32) -> (i32, i32) {
    %c0_i32 = arith.constant 0 : i32
    %c0_i32_0 = arith.constant 0 : i32
    return %arg0, %c0_i32 : i32, i32
  }
  func.func @transform_1(%arg0: i32) -> (i32, i32) {
    %c0_i32 = arith.constant 0 : i32
    %c0_i32_0 = arith.constant 0 : i32
    %c0_i32_1 = arith.constant 0 : i32
    return %c0_i32, %c0_i32_0 : i32, i32
  }
  func.func @transform_2(%arg0: i32) -> (i32, i32) {
    %c0_i32 = arith.constant 0 : i32
    %c0_i32_0 = arith.constant 0 : i32
    %c0_i32_1 = arith.constant 0 : i32
    return %c0_i32, %c0_i32_0 : i32, i32
  }
  func.func @transform_3(%arg0: i32) -> (i32, i32) {
    %c0_i32 = arith.constant 0 : i32
    %c0_i32_0 = arith.constant 0 : i32
    return %arg0, %c0_i32 : i32, i32
  }
  func.func @transform_4(%arg0: i32) -> (i32, i32, i32) {
    %c0_i32 = arith.constant 0 : i32
    %c0_i32_0 = arith.constant 0 : i32
    %c0_i32_1 = arith.constant 0 : i32
    return %arg0, %c0_i32, %c0_i32_0 : i32, i32, i32
  }
}

</mosaic_0001>

<llo_original>
// kernel: conv_block_param_forward.1
$region0: #{conv_block_param_forward.1}
  #allocation0 [shape = 'u32[]', space=smem, size = 0x4, offset = 0x4, fixed_abs, tag = 'smem constant byte address 0x4 - core index']
  #allocation1 [shape = 'u32[72,128]{1,0:T(1,128)}', space=vmem, size = 0x9000, scoped, tag = 'internal scratch']
  %s0 = inlined_call_operand.vmem [shape: bf16[416,36], index: 0, kind: input, shape index: {}]
  %s1 = inlined_call_operand.vmem [shape: bf16[36,128], index: 1, kind: input, shape index: {}]
  %s2 = inlined_call_operand.vmem [shape: f32[1,128], index: 2, kind: input, shape index: {}]
  %s3 = inlined_call_operand.vmem [shape: bf16[416,128], index: 3, kind: output, shape index: {0}]
  %s4 = inlined_call_operand.vmem [shape: f32[2,2,128], index: 4, kind: output, shape index: {1}]
  %5 = xla_tuple %s3, %s4
  %s6 = sld [smem:[#allocation0]]
  $region53: #{conv_block_param_forward.1} parent=0
    _
  %s8 = ssub.s32 1, %s6
  %s9 = scalar_select 0, %s8, %s6
  loop: start=0, step=1, limit=4
  $region2: #{conv_block_param_forward.1} parent=0 // loop_pre_header
    _
  $region3: #{conv_block_param_forward.1} parent=0 // loop_header
    %s11 = sphi 0, %s15
    %p12 = scmp.ge.s32.totalorder %s11, 4
    %s21 = sphi 0, %s23
    %s24 = sphi 0, %s21
    %s25 = sphi 0, %s24
    %s41 = sphi 0, %s25
    %s45 = sphi 0, %s45
    %s47 = sphi 0, %s45
    %s48 = sphi 0, %s47
    %s62 = sphi 0, %s48
    %s66 = sphi 0, %s66
    %s68 = sphi 0, %s66
    %s69 = sphi 0, %s68
    %s83 = sphi 0, %s69
    %s89 = sphi 0, %s91
    %s92 = sphi 0, %s89
    %s93 = sphi 0, %s92
    %s109 = sphi 0, %s93
    %s115 = sphi 0, %s117
    %s118 = sphi 0, %s115
    %s119 = sphi 0, %s118
    %s135 = sphi 0, %s119
  $region4: #{conv_block_param_forward.1} parent=0 // loop_header_branch
    %14 = sbr.rel (%p12) target = $region8
  $region5: #{conv_block_param_forward.1} parent=0 // loop_body
    %s16 = ssub.s32 %s11, 1
    %s17 = ssub.s32 %s11, 2
    %s18 = sadd.s32 %s11, 1
    %s19 = ssub.s32 %s11, %s18
    %p20 = scmp.eq.s32.totalorder %s19, 0
    %s22 = sadd.s32 %s21, 1
    %s23 = scalar_select %p20, %s21, %s22
    %p26 = pneg %p20
    %p27 = scmp.eq.s32.totalorder %s11, 1
    %p28 = por %p26, %p27
    %p29 = scmp.ne.s32.totalorder %s21, %s24
    %p30 = scmp.eq.s32.totalorder %s11, 0
    %p31 = por %p29, %p30
    %p32 = scmp.ne.s32.totalorder %s21, %s24
    %p33 = scmp.eq.s32.totalorder %s16, 1
    %p34 = por %p32, %p33
    %p35 = scmp.ne.s32.totalorder %s24, %s25
    %p36 = scmp.eq.s32.totalorder %s16, 0
    %p37 = por %p35, %p36
    %p38 = scmp.ne.s32.totalorder %s24, %s25
    %p39 = scmp.eq.s32.totalorder %s17, 1
    %p40 = por %p38, %p39
    %p42 = scmp.ne.s32.totalorder %s25, %s41
    %p43 = scmp.eq.s32.totalorder %s17, 0
    %p44 = por %p42, %p43
    %s46 = sadd.s32 %s45, 1
    %p49 = scmp.eq.s32.totalorder %s11, 1
    %p50 = scmp.ne.s32.totalorder %s45, %s47
    %p51 = scmp.eq.s32.totalorder %s11, 0
    %p52 = por %p50, %p51
    %p53 = scmp.ne.s32.totalorder %s45, %s47
    %p54 = scmp.eq.s32.totalorder %s16, 1
    %p55 = por %p53, %p54
    %p56 = scmp.ne.s32.totalorder %s47, %s48
    %p57 = scmp.eq.s32.totalorder %s16, 0
    %p58 = por %p56, %p57
    %p59 = scmp.ne.s32.totalorder %s47, %s48
    %p60 = scmp.eq.s32.totalorder %s17, 1
    %p61 = por %p59, %p60
    %p63 = scmp.ne.s32.totalorder %s48, %s62
    %p64 = scmp.eq.s32.totalorder %s17, 0
    %p65 = por %p63, %p64
    %s67 = sadd.s32 %s66, 1
    %p70 = scmp.eq.s32.totalorder %s11, 1
    %p71 = scmp.ne.s32.totalorder %s66, %s68
    %p72 = scmp.eq.s32.totalorder %s11, 0
    %p73 = por %p71, %p72
    %p74 = scmp.ne.s32.totalorder %s66, %s68
    %p75 = scmp.eq.s32.totalorder %s16, 1
    %p76 = por %p74, %p75
    %p77 = scmp.ne.s32.totalorder %s68, %s69
    %p78 = scmp.eq.s32.totalorder %s16, 0
    %p79 = por %p77, %p78
    %p80 = scmp.ne.s32.totalorder %s68, %s69
    %p81 = scmp.eq.s32.totalorder %s17, 1
    %p82 = por %p80, %p81
    %p84 = scmp.ne.s32.totalorder %s69, %s83
    %p85 = scmp.eq.s32.totalorder %s17, 0
    %p86 = por %p84, %p85
    %s87 = ssub.s32 %s11, %s18
    %p88 = scmp.eq.s32.totalorder %s87, 0
    %s90 = sadd.s32 %s89, 1
    %s91 = scalar_select %p88, %s89, %s90
    %p94 = pneg %p88
    %p95 = scmp.eq.s32.totalorder %s11, 1
    %p96 = por %p94, %p95
    %p97 = scmp.ne.s32.totalorder %s89, %s92
    %p98 = scmp.eq.s32.totalorder %s11, 0
    %p99 = por %p97, %p98
    %p100 = scmp.ne.s32.totalorder %s89, %s92
    %p101 = scmp.eq.s32.totalorder %s16, 1
    %p102 = por %p100, %p101
    %p103 = scmp.ne.s32.totalorder %s92, %s93
    %p104 = scmp.eq.s32.totalorder %s16, 0
    %p105 = por %p103, %p104
    %p106 = scmp.ne.s32.totalorder %s92, %s93
    %p107 = scmp.eq.s32.totalorder %s17, 1
    %p108 = por %p106, %p107
    %p110 = scmp.ne.s32.totalorder %s93, %s109
    %p111 = scmp.eq.s32.totalorder %s17, 0
    %p112 = por %p110, %p111
    %s113 = ssub.s32 %s11, %s18
    %p114 = scmp.eq.s32.totalorder %s113, 0
    %s116 = sadd.s32 %s115, 1
    %s117 = scalar_select %p114, %s115, %s116
    %p120 = pneg %p114
    %p121 = scmp.eq.s32.totalorder %s11, 1
    %p122 = por %p120, %p121
    %p123 = scmp.ne.s32.totalorder %s115, %s118
    %p124 = scmp.eq.s32.totalorder %s11, 0
    %p125 = por %p123, %p124
    %p126 = scmp.ne.s32.totalorder %s115, %s118
    %p127 = scmp.eq.s32.totalorder %s16, 1
    %p128 = por %p126, %p127
    %p129 = scmp.ne.s32.totalorder %s118, %s119
    %p130 = scmp.eq.s32.totalorder %s16, 0
    %p131 = por %p129, %p130
    %p132 = scmp.ne.s32.totalorder %s118, %s119
    %p133 = scmp.eq.s32.totalorder %s17, 1
    %p134 = por %p132, %p133
    %p136 = scmp.ne.s32.totalorder %s119, %s135
    %p137 = scmp.eq.s32.totalorder %s17, 0
    %p138 = por %p136, %p137
    %p139 = scmp.le.s32.totalorder 1, %s11
    %p140 = scmp.lt.s32.totalorder %s11, 3
    %p141 = pnand %p139, %p140
    %p142 = pneg %p141
    // Predicated region
    $region9: #{conv_block_param_forward.1} parent=5 // pred_check
      _
    $region10: #{conv_block_param_forward.1} parent=5 // pred_check_branch
      %144 = sbr.rel (%p141) target = $region12
    $region11: #{conv_block_param_forward.1} parent=5 // pred_region
      %s145 = ssub.s32 %s11, 1
      // Predicated region
      $region13: #{conv_block_param_forward.1} parent=11 // pred_check
        %p146 = pneg %p58
      $region14: #{conv_block_param_forward.1} parent=11 // pred_check_branch
        %148 = sbr.rel (%p146) target = $region16
      $region15: #{conv_block_param_forward.1} parent=11 // pred_region
        _
      $region16: #{conv_block_param_forward.1} parent=11 // pred_fallthru
        _
      // Predicated region
      $region17: #{conv_block_param_forward.1} parent=11 // pred_check
        %p149 = pneg %p79
      $region18: #{conv_block_param_forward.1} parent=11 // pred_check_branch
        %151 = sbr.rel (%p149) target = $region20
      $region19: #{conv_block_param_forward.1} parent=11 // pred_region
        _
      $region20: #{conv_block_param_forward.1} parent=11 // pred_fallthru
        _
    $region12: #{conv_block_param_forward.1} parent=5 // pred_fallthru
      _
    %p152 = scmp.lt.s32.totalorder %s11, 2
    // Predicated region
    $region21: #{conv_block_param_forward.1} parent=5 // pred_check
      %p153 = pneg %p152
    $region22: #{conv_block_param_forward.1} parent=5 // pred_check_branch
      %155 = sbr.rel (%p153) target = $region24
    $region23: #{conv_block_param_forward.1} parent=5 // pred_region
      // Predicated region
      $region25: #{conv_block_param_forward.1} parent=23 // pred_check
        %p156 = pneg %p31
      $region26: #{conv_block_param_forward.1} parent=23 // pred_check_branch
        %158 = sbr.rel (%p156) target = $region28
      $region27: #{conv_block_param_forward.1} parent=23 // pred_region
        %s159 = smul.u32 26, %s11
        %p160 = scmp.lt.s32.totalorder %s159, 51
        %s161 = scalar_select %p160, %s159, 51
        %s162 = smul.addr %s161, 4
        %s163 = scalar_lea.vmem %s0, %s162
        %s164 = smul.u32 26, %s11
      $region28: #{conv_block_param_forward.1} parent=23 // pred_fallthru
        _
    $region24: #{conv_block_param_forward.1} parent=5 // pred_fallthru
      _
    %p165 = scmp.le.s32.totalorder 1, %s11
    %p166 = scmp.lt.s32.totalorder %s11, 3
    %p167 = pnand %p165, %p166
    %p168 = pneg %p167
    // Predicated region
    $region29: #{conv_block_param_forward.1} parent=5 // pred_check
      _
    $region30: #{conv_block_param_forward.1} parent=5 // pred_check_branch
      %170 = sbr.rel (%p167) target = $region32
    $region31: #{conv_block_param_forward.1} parent=5 // pred_region
      %s171 = ssub.s32 %s11, 1
      %s172 = smul.u32 26, %s16
      %p173 = scmp.lt.s32.totalorder %s172, 51
      %s174 = scalar_select %p173, %s172, 51
      %s175 = smul.addr %s174, 4
      %s176 = scalar_lea.vmem %s0, %s175
      %p177 = pneg %p37
      %p178 = pneg %p34
      %p179 = pneg %p58
      %p180 = pneg %p55
      %p181 = pneg %p79
      %p182 = pneg %p76
      %p183 = pneg %p105
      %p184 = pneg %p102
      %s185 = smul.u32 26, %s16
      %p186 = scmp.lt.s32.totalorder %s185, 51
      %s187 = scalar_select %p186, %s185, 51
      %s188 = smul.addr %s187, 4
      %s189 = scalar_lea.vmem %s3, %s188
      %p190 = pneg %p131
      %p191 = pneg %p128
      %p192 = scmp.lt.s32.totalorder %s16, 1
      %s193 = scalar_select %p192, %s16, 1
      %s194 = smul.addr %s193, 2
      %s195 = scalar_lea.vmem %s4, %s194
      %s196 = smul.u32 26, %s16
      %p197 = scmp.lt.s32.totalorder %s196, 51
      %s198 = scalar_select %p197, %s196, 51
      %s199 = smul.addr %s198, 4
      %s200 = scalar_lea.vmem %s0, %s199
      %s201 = smul.u32 26, %s16
      %s202 = smul.u32 26, %s16
      %p203 = scmp.lt.s32.totalorder %s202, 51
      %s204 = scalar_select %p203, %s202, 51
      %s205 = smul.addr %s204, 4
      %s206 = scalar_lea.vmem %s3, %s205
      %s207 = smul.u32 26, %s16
      %p208 = scmp.lt.s32.totalorder %s16, 1
      %s209 = scalar_select %p208, %s16, 1
      %s210 = smul.addr %s209, 2
      %s211 = scalar_lea.vmem %s4, %s210
      %v213 = vld [vmem:[%s200] sm:$0xf]
      %v214 = vld [vmem:[%s200 + $0x4] sm:$0xf]
      %v215 = vld [vmem:[%s200 + $0x8] sm:$0xf]
      %v216 = vld [vmem:[%s200 + $0xc] sm:$0xf]
      %v217 = vld [vmem:[%s200 + $0x10] sm:$0xf]
      %v218 = vld [vmem:[%s200 + $0x14] sm:$0xf]
      %v219 = vld [vmem:[%s200 + $0x18] sm:$0xf]
      %v220 = vld [vmem:[%s200 + $0x1c] sm:$0xf]
      %v221 = vld [vmem:[%s200 + $0x20] sm:$0xf]
      %v222 = vld [vmem:[%s200 + $0x24] sm:$0xf]
      %v223 = vld [vmem:[%s200 + $0x28] sm:$0xf]
      %v224 = vld [vmem:[%s200 + $0x2c] sm:$0xf]
      %v225 = vld [vmem:[%s200 + $0x30] sm:$0xf]
      %v226 = vld [vmem:[%s200 + $0x34] sm:$0xf]
      %v227 = vld [vmem:[%s200 + $0x38] sm:$0xf]
      %v228 = vld [vmem:[%s200 + $0x3c] sm:$0xf]
      %v229 = vld [vmem:[%s200 + $0x40] sm:$0xf]
      %v230 = vld [vmem:[%s200 + $0x44] sm:$0xf]
      %v231 = vld [vmem:[%s200 + $0x48] sm:$0xf]
      %v232 = vld [vmem:[%s200 + $0x4c] sm:$0xf]
      %v233 = vld [vmem:[%s200 + $0x50] sm:$0xf]
      %v234 = vld [vmem:[%s200 + $0x54] sm:$0xf]
      %v235 = vld [vmem:[%s200 + $0x58] sm:$0xf]
      %v236 = vld [vmem:[%s200 + $0x5c] sm:$0xf]
      %v237 = vld [vmem:[%s200 + $0x60] sm:$0xf]
      %v238 = vld [vmem:[%s200 + $0x64] sm:$0xf]
      %v239 = vld [vmem:[%s1] sm:$0xf]
      %v240 = vld [vmem:[%s1 + $0x4] sm:$0xf]
      %v241 = vld [vmem:[%s1 + $0x8] sm:$0xf]
      %v242 = vld [vmem:[%s1 + $0xc] sm:$0xf]
      %v243 = vld [vmem:[%s1 + $0x10] sm:$0x3]
      %v244 = vld [vmem:[%s2] sm:$0x1]
      %v246 = vperm.slane %v244, 0
      %v274 = vunpack.c.l.b16 %v213
      %v275 = vunpack.c.l.b16 %v214
      %v276 = vunpack.c.l.b16 %v215
      %v277 = vunpack.c.l.b16 %v216
      %v278 = vunpack.c.l.b16 %v217
      %v279 = vunpack.c.l.b16 %v218
      %v280 = vunpack.c.l.b16 %v219
      %v281 = vunpack.c.l.b16 %v220
      %v282 = vunpack.c.l.b16 %v221
      %v283 = vunpack.c.l.b16 %v222
      %v284 = vunpack.c.l.b16 %v223
      %v285 = vunpack.c.l.b16 %v224
      %v286 = vunpack.c.l.b16 %v225
      %v287 = vunpack.c.l.b16 %v226
      %v288 = vunpack.c.l.b16 %v227
      %v289 = vunpack.c.l.b16 %v228
      %v290 = vunpack.c.l.b16 %v229
      %v291 = vunpack.c.l.b16 %v230
      %v292 = vunpack.c.l.b16 %v231
      %v293 = vunpack.c.l.b16 %v232
      %v294 = vunpack.c.l.b16 %v233
      %v295 = vunpack.c.l.b16 %v234
      %v296 = vunpack.c.l.b16 %v235
      %v297 = vunpack.c.l.b16 %v236
      %v298 = vunpack.c.l.b16 %v237
      %v299 = vunpack.c.l.b16 %v238
      %v300 = vpack.c.b16 %v275, %v274
      %v301 = vpack.c.b16 %v277, %v276
      %v302 = vpack.c.b16 %v279, %v278
      %v303 = vpack.c.b16 %v281, %v280
      %v304 = vpack.c.b16 %v283, %v282
      %v305 = vpack.c.b16 %v285, %v284
      %v306 = vpack.c.b16 %v287, %v286
      %v307 = vpack.c.b16 %v289, %v288
      %v308 = vpack.c.b16 %v291, %v290
      %v309 = vpack.c.b16 %v293, %v292
      %v310 = vpack.c.b16 %v295, %v294
      %v311 = vpack.c.b16 %v297, %v296
      %v312 = vpack.c.b16 %v299, %v298
      %v318 = vunpack.c.l.b16 %v239
      %v319 = vunpack.c.l.b16 %v240
      %v320 = vunpack.c.l.b16 %v241
      %v321 = vunpack.c.l.b16 %v242
      %v322 = vunpack.c.l.b16 %v243
      %v323 = vpack.c.b16 %v319, %v318
      %v324 = vpack.c.b16 %v321, %v320
      %v325 = vpack.c.b16 %v322, %v322
      %vm328 = vcmask 293888
      %v330 = vsel %vm328, %v300, 0
      %v333 = vsel %vm328, %v301, 0
      %v336 = vsel %vm328, %v302, 0
      %v339 = vsel %vm328, %v303, 0
      %v342 = vsel %vm328, %v304, 0
      %v345 = vsel %vm328, %v305, 0
      %v348 = vsel %vm328, %v306, 0
      %v351 = vsel %vm328, %v307, 0
      %v354 = vsel %vm328, %v308, 0
      %v357 = vsel %vm328, %v309, 0
      %v360 = vsel %vm328, %v310, 0
      %v363 = vsel %vm328, %v311, 0
      %v366 = vsel %vm328, %v312, 0
      %vm368 = vcmask 1041408
      %v370 = vsel %vm368, %v325, 0
      %372 = vmatpush.bf16.msra.mxu0 0
      %373 = vmatpush.bf16.msra.mxu0 0
      %374 = vmatpush.bf16.msra.mxu0 0
      %375 = vmatpush.bf16.msra.mxu0 0
      %376 = vmatpush.bf16.msra.mxu0 0
      %377 = vmatpush.bf16.msra.mxu0 %v370
      %378 = vmatpush.bf16.msra.mxu0 %v324
      %379 = vmatpush.bf16.msra.mxu0 %v323
      %380 = vmatmul.bf16.gmra.mxu0 %v330
      %v381 = vpop.f32.mrf.mxu0
      %v382 = vadd.f32 %v246, %v381
      %v383 = vpop.f32.mrf.mxu0
      %v384 = vadd.f32 %v246, %v383
      %385 = vmatmul.bf16.gmra.mxu0 %v333
      %v386 = vpop.f32.mrf.mxu0
      %v387 = vadd.f32 %v246, %v386
      %v388 = vpop.f32.mrf.mxu0
      %v389 = vadd.f32 %v246, %v388
      %390 = vmatmul.bf16.gmra.mxu0 %v336
      %v391 = vpop.f32.mrf.mxu0
      %v392 = vadd.f32 %v246, %v391
      %v393 = vpop.f32.mrf.mxu0
      %v394 = vadd.f32 %v246, %v393
      %395 = vmatmul.bf16.gmra.mxu0 %v339
      %v396 = vpop.f32.mrf.mxu0
      %v397 = vadd.f32 %v246, %v396
      %v398 = vpop.f32.mrf.mxu0
      %v399 = vadd.f32 %v246, %v398
      %400 = vmatmul.bf16.gmra.mxu0 %v342
      %v401 = vpop.f32.mrf.mxu0
      %v402 = vadd.f32 %v246, %v401
      %v403 = vpop.f32.mrf.mxu0
      %v404 = vadd.f32 %v246, %v403
      %405 = vmatmul.bf16.gmra.mxu0 %v345
      %v406 = vpop.f32.mrf.mxu0
      %v407 = vadd.f32 %v246, %v406
      %v408 = vpop.f32.mrf.mxu0
      %v409 = vadd.f32 %v246, %v408
      %410 = vmatmul.bf16.gmra.mxu0 %v348
      %v411 = vpop.f32.mrf.mxu0
      %v412 = vadd.f32 %v246, %v411
      %v413 = vpop.f32.mrf.mxu0
      %v414 = vadd.f32 %v246, %v413
      %415 = vmatmul.bf16.gmra.mxu0 %v351
      %v416 = vpop.f32.mrf.mxu0
      %v417 = vadd.f32 %v246, %v416
      %v418 = vpop.f32.mrf.mxu0
      %v419 = vadd.f32 %v246, %v418
      %420 = vmatmul.bf16.gmra.mxu0 %v354
      %v421 = vpop.f32.mrf.mxu0
      %v422 = vadd.f32 %v246, %v421
      %v423 = vpop.f32.mrf.mxu0
      %v424 = vadd.f32 %v246, %v423
      %425 = vmatmul.bf16.gmra.mxu0 %v357
      %v426 = vpop.f32.mrf.mxu0
      %v427 = vadd.f32 %v246, %v426
      %v428 = vpop.f32.mrf.mxu0
      %v429 = vadd.f32 %v246, %v428
      %430 = vmatmul.bf16.gmra.mxu0 %v360
      %v431 = vpop.f32.mrf.mxu0
      %v432 = vadd.f32 %v246, %v431
      %v433 = vpop.f32.mrf.mxu0
      %v434 = vadd.f32 %v246, %v433
      %435 = vmatmul.bf16.gmra.mxu0 %v363
      %v436 = vpop.f32.mrf.mxu0
      %v437 = vadd.f32 %v246, %v436
      %v438 = vpop.f32.mrf.mxu0
      %v439 = vadd.f32 %v246, %v438
      %440 = vmatmul.bf16.gmra.mxu0 %v366
      %v441 = vpop.f32.mrf.mxu0
      %v442 = vadd.f32 %v246, %v441
      %v443 = vpop.f32.mrf.mxu0
      %v444 = vadd.f32 %v246, %v443
      %445 = vdwg.mxu0
      %v446 = vmax.f32 %v382, 0.0
      %v447 = vmax.f32 %v384, 0.0
      %v448 = vmax.f32 %v387, 0.0
      %v449 = vmax.f32 %v389, 0.0
      %v450 = vmax.f32 %v392, 0.0
      %v451 = vmax.f32 %v394, 0.0
      %v452 = vmax.f32 %v397, 0.0
      %v453 = vmax.f32 %v399, 0.0
      %v454 = vmax.f32 %v402, 0.0
      %v455 = vmax.f32 %v404, 0.0
      %v456 = vmax.f32 %v407, 0.0
      %v457 = vmax.f32 %v409, 0.0
      %v458 = vmax.f32 %v412, 0.0
      %v459 = vmax.f32 %v414, 0.0
      %v460 = vmax.f32 %v417, 0.0
      %v461 = vmax.f32 %v419, 0.0
      %v462 = vmax.f32 %v422, 0.0
      %v463 = vmax.f32 %v424, 0.0
      %v464 = vmax.f32 %v427, 0.0
      %v465 = vmax.f32 %v429, 0.0
      %v466 = vmax.f32 %v432, 0.0
      %v467 = vmax.f32 %v434, 0.0
      %v468 = vmax.f32 %v437, 0.0
      %v469 = vmax.f32 %v439, 0.0
      %v470 = vmax.f32 %v442, 0.0
      %v471 = vmax.f32 %v444, 0.0
      %s472 = smul.u32 %s16, 208
      %v473 = vlaneseq
      %v474 = vshrl.u32 %v473, 7
      %v475 = vadd.s32 %v474, 8
      %v476 = vadd.s32 %v474, 16
      %v477 = vadd.s32 %v474, 24
      %v478 = vadd.s32 %v474, 32
      %v479 = vadd.s32 %v474, 40
      %v480 = vadd.s32 %v474, 48
      %v481 = vadd.s32 %v474, 56
      %v482 = vadd.s32 %v474, 64
      %v483 = vadd.s32 %v474, 72
      %v484 = vadd.s32 %v474, 80
      %v485 = vadd.s32 %v474, 88
      %v486 = vadd.s32 %v474, 96
      %v487 = vadd.s32 %v474, 104
      %v488 = vadd.s32 %v474, 112
      %v489 = vadd.s32 %v474, 120
      %v490 = vadd.s32 %v474, 128
      %v491 = vadd.s32 %v474, 136
      %v492 = vadd.s32 %v474, 144
      %v493 = vadd.s32 %v474, 152
      %v494 = vadd.s32 %v474, 160
      %v495 = vadd.s32 %v474, 168
      %v496 = vadd.s32 %v474, 176
      %v497 = vadd.s32 %v474, 184
      %v498 = vadd.s32 %v474, 192
      %v499 = vadd.s32 %v474, 200
      %v500 = vstv %s472
      %v501 = vadd.s32 %v500, %v474
      %v502 = vadd.s32 %v500, %v475
      %v503 = vadd.s32 %v500, %v476
      %v504 = vadd.s32 %v500, %v477
      %v505 = vadd.s32 %v500, %v478
      %v506 = vadd.s32 %v500, %v479
      %v507 = vadd.s32 %v500, %v480
      %v508 = vadd.s32 %v500, %v481
      %v509 = vadd.s32 %v500, %v482
      %v510 = vadd.s32 %v500, %v483
      %v511 = vadd.s32 %v500, %v484
      %v512 = vadd.s32 %v500, %v485
      %v513 = vadd.s32 %v500, %v486
      %v514 = vadd.s32 %v500, %v487
      %v515 = vadd.s32 %v500, %v488
      %v516 = vadd.s32 %v500, %v489
      %v517 = vadd.s32 %v500, %v490
      %v518 = vadd.s32 %v500, %v491
      %v519 = vadd.s32 %v500, %v492
      %v520 = vadd.s32 %v500, %v493
      %v521 = vadd.s32 %v500, %v494
      %v522 = vadd.s32 %v500, %v495
      %v523 = vadd.s32 %v500, %v496
      %v524 = vadd.s32 %v500, %v497
      %v525 = vadd.s32 %v500, %v498
      %v526 = vadd.s32 %v500, %v499
      %vm527 = vcmp.lt.s32.totalorder %v501, 392
      %vm528 = vcmp.lt.s32.totalorder %v502, 392
      %vm529 = vcmp.lt.s32.totalorder %v503, 392
      %vm530 = vcmp.lt.s32.totalorder %v504, 392
      %vm531 = vcmp.lt.s32.totalorder %v505, 392
      %vm532 = vcmp.lt.s32.totalorder %v506, 392
      %vm533 = vcmp.lt.s32.totalorder %v507, 392
      %vm534 = vcmp.lt.s32.totalorder %v508, 392
      %vm535 = vcmp.lt.s32.totalorder %v509, 392
      %vm536 = vcmp.lt.s32.totalorder %v510, 392
      %vm537 = vcmp.lt.s32.totalorder %v511, 392
      %vm538 = vcmp.lt.s32.totalorder %v512, 392
      %vm539 = vcmp.lt.s32.totalorder %v513, 392
      %vm540 = vcmp.lt.s32.totalorder %v514, 392
      %vm541 = vcmp.lt.s32.totalorder %v515, 392
      %vm542 = vcmp.lt.s32.totalorder %v516, 392
      %vm543 = vcmp.lt.s32.totalorder %v517, 392
      %vm544 = vcmp.lt.s32.totalorder %v518, 392
      %vm545 = vcmp.lt.s32.totalorder %v519, 392
      %vm546 = vcmp.lt.s32.totalorder %v520, 392
      %vm547 = vcmp.lt.s32.totalorder %v521, 392
      %vm548 = vcmp.lt.s32.totalorder %v522, 392
      %vm549 = vcmp.lt.s32.totalorder %v523, 392
      %vm550 = vcmp.lt.s32.totalorder %v524, 392
      %vm551 = vcmp.lt.s32.totalorder %v525, 392
      %vm552 = vcmp.lt.s32.totalorder %v526, 392
      %v553 = vsel %vm527, 1, 0
      %v554 = vsel %vm528, 1, 0
      %v555 = vsel %vm529, 1, 0
      %v556 = vsel %vm530, 1, 0
      %v557 = vsel %vm531, 1, 0
      %v558 = vsel %vm532, 1, 0
      %v559 = vsel %vm533, 1, 0
      %v560 = vsel %vm534, 1, 0
      %v561 = vsel %vm535, 1, 0
      %v562 = vsel %vm536, 1, 0
      %v563 = vsel %vm537, 1, 0
      %v564 = vsel %vm538, 1, 0
      %v565 = vsel %vm539, 1, 0
      %v566 = vsel %vm540, 1, 0
      %v567 = vsel %vm541, 1, 0
      %v568 = vsel %vm542, 1, 0
      %v569 = vsel %vm543, 1, 0
      %v570 = vsel %vm544, 1, 0
      %v571 = vsel %vm545, 1, 0
      %v572 = vsel %vm546, 1, 0
      %v573 = vsel %vm547, 1, 0
      %v574 = vsel %vm548, 1, 0
      %v575 = vsel %vm549, 1, 0
      %v576 = vsel %vm550, 1, 0
      %v577 = vsel %vm551, 1, 0
      %v578 = vsel %vm552, 1, 0
      %vm579 = vcmp.eq.s32.totalorder %v553, 1
      %vm580 = vcmp.eq.s32.totalorder %v554, 1
      %vm581 = vcmp.eq.s32.totalorder %v555, 1
      %vm582 = vcmp.eq.s32.totalorder %v556, 1
      %vm583 = vcmp.eq.s32.totalorder %v557, 1
      %vm584 = vcmp.eq.s32.totalorder %v558, 1
      %vm585 = vcmp.eq.s32.totalorder %v559, 1
      %vm586 = vcmp.eq.s32.totalorder %v560, 1
      %vm587 = vcmp.eq.s32.totalorder %v561, 1
      %vm588 = vcmp.eq.s32.totalorder %v562, 1
      %vm589 = vcmp.eq.s32.totalorder %v563, 1
      %vm590 = vcmp.eq.s32.totalorder %v564, 1
      %vm591 = vcmp.eq.s32.totalorder %v565, 1
      %vm592 = vcmp.eq.s32.totalorder %v566, 1
      %vm593 = vcmp.eq.s32.totalorder %v567, 1
      %vm594 = vcmp.eq.s32.totalorder %v568, 1
      %vm595 = vcmp.eq.s32.totalorder %v569, 1
      %vm596 = vcmp.eq.s32.totalorder %v570, 1
      %vm597 = vcmp.eq.s32.totalorder %v571, 1
      %vm598 = vcmp.eq.s32.totalorder %v572, 1
      %vm599 = vcmp.eq.s32.totalorder %v573, 1
      %vm600 = vcmp.eq.s32.totalorder %v574, 1
      %vm601 = vcmp.eq.s32.totalorder %v575, 1
      %vm602 = vcmp.eq.s32.totalorder %v576, 1
      %vm603 = vcmp.eq.s32.totalorder %v577, 1
      %vm604 = vcmp.eq.s32.totalorder %v578, 1
      %v605 = vsel %vm579, %v446, 0.0
      %v606 = vsel %vm580, %v447, 0.0
      %v607 = vsel %vm581, %v448, 0.0
      %v608 = vsel %vm582, %v449, 0.0
      %v609 = vsel %vm583, %v450, 0.0
      %v610 = vsel %vm584, %v451, 0.0
      %v611 = vsel %vm585, %v452, 0.0
      %v612 = vsel %vm586, %v453, 0.0
      %v613 = vsel %vm587, %v454, 0.0
      %v614 = vsel %vm588, %v455, 0.0
      %v615 = vsel %vm589, %v456, 0.0
      %v616 = vsel %vm590, %v457, 0.0
      %v617 = vsel %vm591, %v458, 0.0
      %v618 = vsel %vm592, %v459, 0.0
      %v619 = vsel %vm593, %v460, 0.0
      %v620 = vsel %vm594, %v461, 0.0
      %v621 = vsel %vm595, %v462, 0.0
      %v622 = vsel %vm596, %v463, 0.0
      %v623 = vsel %vm597, %v464, 0.0
      %v624 = vsel %vm598, %v465, 0.0
      %v625 = vsel %vm599, %v466, 0.0
      %v626 = vsel %vm600, %v467, 0.0
      %v627 = vsel %vm601, %v468, 0.0
      %v628 = vsel %vm602, %v469, 0.0
      %v629 = vsel %vm603, %v470, 0.0
      %v630 = vsel %vm604, %v471, 0.0
      %v631 = vpack.c.bf16 %v605, %v605
      %v632 = vpack.c.bf16 %v606, %v606
      %v633 = vpack.c.bf16 %v607, %v607
      %v634 = vpack.c.bf16 %v608, %v608
      %v635 = vpack.c.bf16 %v609, %v609
      %v636 = vpack.c.bf16 %v610, %v610
      %v637 = vpack.c.bf16 %v611, %v611
      %v638 = vpack.c.bf16 %v612, %v612
      %v639 = vpack.c.bf16 %v613, %v613
      %v640 = vpack.c.bf16 %v614, %v614
      %v641 = vpack.c.bf16 %v615, %v615
      %v642 = vpack.c.bf16 %v616, %v616
      %v643 = vpack.c.bf16 %v617, %v617
      %v644 = vpack.c.bf16 %v618, %v618
      %v645 = vpack.c.bf16 %v619, %v619
      %v646 = vpack.c.bf16 %v620, %v620
      %v647 = vpack.c.bf16 %v621, %v621
      %v648 = vpack.c.bf16 %v622, %v622
      %v649 = vpack.c.bf16 %v623, %v623
      %v650 = vpack.c.bf16 %v624, %v624
      %v651 = vpack.c.bf16 %v625, %v625
      %v652 = vpack.c.bf16 %v626, %v626
      %v653 = vpack.c.bf16 %v627, %v627
      %v654 = vpack.c.bf16 %v628, %v628
      %v655 = vpack.c.bf16 %v629, %v629
      %v656 = vpack.c.bf16 %v630, %v630
      %657 = vst [vmem:[%s206] sm:$0xf] %v631
      %658 = vst [vmem:[%s206 + $0x4] sm:$0xf] %v632
      %659 = vst [vmem:[%s206 + $0x8] sm:$0xf] %v633
      %660 = vst [vmem:[%s206 + $0xc] sm:$0xf] %v634
      %661 = vst [vmem:[%s206 + $0x10] sm:$0xf] %v635
      %662 = vst [vmem:[%s206 + $0x14] sm:$0xf] %v636
      %663 = vst [vmem:[%s206 + $0x18] sm:$0xf] %v637
      %664 = vst [vmem:[%s206 + $0x1c] sm:$0xf] %v638
      %665 = vst [vmem:[%s206 + $0x20] sm:$0xf] %v639
      %666 = vst [vmem:[%s206 + $0x24] sm:$0xf] %v640
      %667 = vst [vmem:[%s206 + $0x28] sm:$0xf] %v641
      %668 = vst [vmem:[%s206 + $0x2c] sm:$0xf] %v642
      %669 = vst [vmem:[%s206 + $0x30] sm:$0xf] %v643
      %670 = vst [vmem:[%s206 + $0x34] sm:$0xf] %v644
      %671 = vst [vmem:[%s206 + $0x38] sm:$0xf] %v645
      %672 = vst [vmem:[%s206 + $0x3c] sm:$0xf] %v646
      %673 = vst [vmem:[%s206 + $0x40] sm:$0xf] %v647
      %674 = vst [vmem:[%s206 + $0x44] sm:$0xf] %v648
      %675 = vst [vmem:[%s206 + $0x48] sm:$0xf] %v649
      %676 = vst [vmem:[%s206 + $0x4c] sm:$0xf] %v650
      %677 = vst [vmem:[%s206 + $0x50] sm:$0xf] %v651
      %678 = vst [vmem:[%s206 + $0x54] sm:$0xf] %v652
      %679 = vst [vmem:[%s206 + $0x58] sm:$0xf] %v653
      %680 = vst [vmem:[%s206 + $0x5c] sm:$0xf] %v654
      %681 = vst [vmem:[%s206 + $0x60] sm:$0xf] %v655
      %682 = vst [vmem:[%s206 + $0x64] sm:$0xf] %v656
      %v683 = vadd.f32 %v605, %v606
      %v684 = vadd.f32 %v683, %v607
      %v685 = vadd.f32 %v684, %v608
      %v686 = vadd.f32 %v685, %v609
      %v687 = vadd.f32 %v686, %v610
      %v688 = vadd.f32 %v687, %v611
      %v689 = vadd.f32 %v688, %v612
      %v690 = vadd.f32 %v689, %v613
      %v691 = vadd.f32 %v690, %v614
      %v692 = vadd.f32 %v691, %v615
      %v693 = vadd.f32 %v692, %v616
      %v694 = vadd.f32 %v693, %v617
      %v695 = vadd.f32 %v694, %v618
      %v696 = vadd.f32 %v695, %v619
      %v697 = vadd.f32 %v696, %v620
      %v698 = vadd.f32 %v697, %v621
      %v699 = vadd.f32 %v698, %v622
      %v700 = vadd.f32 %v699, %v623
      %v701 = vadd.f32 %v700, %v624
      %v702 = vadd.f32 %v701, %v625
      %v703 = vadd.f32 %v702, %v626
      %v704 = vadd.f32 %v703, %v627
      %v705 = vadd.f32 %v704, %v628
      %v706 = vadd.f32 %v705, %v629
      %v707 = vadd.f32 %v706, %v630
      %v708 = vrot.slane %v707, 4
      %v709 = vadd.f32 %v707, %v708
      %v710 = vrot.slane %v709, 2
      %v711 = vadd.f32 %v709, %v710
      %v712 = vrot.slane %v711, 1
      %v713 = vadd.f32 %v711, %v712
      %v714 = vmul.f32 %v605, %v605
      %v715 = vmul.f32 %v606, %v606
      %v716 = vmul.f32 %v607, %v607
      %v717 = vmul.f32 %v608, %v608
      %v718 = vmul.f32 %v609, %v609
      %v719 = vmul.f32 %v610, %v610
      %v720 = vmul.f32 %v611, %v611
      %v721 = vmul.f32 %v612, %v612
      %v722 = vmul.f32 %v613, %v613
      %v723 = vmul.f32 %v614, %v614
      %v724 = vmul.f32 %v615, %v615
      %v725 = vmul.f32 %v616, %v616
      %v726 = vmul.f32 %v617, %v617
      %v727 = vmul.f32 %v618, %v618
      %v728 = vmul.f32 %v619, %v619
      %v729 = vmul.f32 %v620, %v620
      %v730 = vmul.f32 %v621, %v621
      %v731 = vmul.f32 %v622, %v622
      %v732 = vmul.f32 %v623, %v623
      %v733 = vmul.f32 %v624, %v624
      %v734 = vmul.f32 %v625, %v625
      %v735 = vmul.f32 %v626, %v626
      %v736 = vmul.f32 %v627, %v627
      %v737 = vmul.f32 %v628, %v628
      %v738 = vmul.f32 %v629, %v629
      %v739 = vmul.f32 %v630, %v630
      %v740 = vadd.f32 %v714, %v715
      %v741 = vadd.f32 %v740, %v716
      %v742 = vadd.f32 %v741, %v717
      %v743 = vadd.f32 %v742, %v718
      %v744 = vadd.f32 %v743, %v719
      %v745 = vadd.f32 %v744, %v720
      %v746 = vadd.f32 %v745, %v721
      %v747 = vadd.f32 %v746, %v722
      %v748 = vadd.f32 %v747, %v723
      %v749 = vadd.f32 %v748, %v724
      %v750 = vadd.f32 %v749, %v725
      %v751 = vadd.f32 %v750, %v726
      %v752 = vadd.f32 %v751, %v727
      %v753 = vadd.f32 %v752, %v728
      %v754 = vadd.f32 %v753, %v729
      %v755 = vadd.f32 %v754, %v730
      %v756 = vadd.f32 %v755, %v731
      %v757 = vadd.f32 %v756, %v732
      %v758 = vadd.f32 %v757, %v733
      %v759 = vadd.f32 %v758, %v734
      %v760 = vadd.f32 %v759, %v735
      %v761 = vadd.f32 %v760, %v736
      %v762 = vadd.f32 %v761, %v737
      %v763 = vadd.f32 %v762, %v738
      %v764 = vadd.f32 %v763, %v739
      %v765 = vrot.slane %v764, 4
      %v766 = vadd.f32 %v764, %v765
      %v767 = vrot.slane %v766, 2
      %v768 = vadd.f32 %v766, %v767
      %v769 = vrot.slane %v768, 1
      %v770 = vadd.f32 %v768, %v769
      %vm771 = vcmask 1040384
      %v772 = vsel %vm771, %v713, %v770
      %773 = vst [vmem:[%s211] sm:$0x3] %v772
      %s774 = smul.u32 26, %s16
      %p775 = scmp.lt.s32.totalorder %s774, 51
      %s776 = scalar_select %p775, %s774, 51
      %s777 = smul.addr %s776, 4
      %s778 = scalar_lea.vmem %s3, %s777
      %p779 = scmp.lt.s32.totalorder %s16, 1
      %s780 = scalar_select %p779, %s16, 1
      %s781 = smul.addr %s780, 2
      %s782 = scalar_lea.vmem %s4, %s781
      // Predicated region
      $region33: #{conv_block_param_forward.1} parent=31 // pred_check
        %p783 = pneg %p102
      $region34: #{conv_block_param_forward.1} parent=31 // pred_check_branch
        %785 = sbr.rel (%p783) target = $region36
      $region35: #{conv_block_param_forward.1} parent=31 // pred_region
        %s786 = smul.u32 26, %s16
      $region36: #{conv_block_param_forward.1} parent=31 // pred_fallthru
        _
      // Predicated region
      $region37: #{conv_block_param_forward.1} parent=31 // pred_check
        %p787 = pneg %p128
      $region38: #{conv_block_param_forward.1} parent=31 // pred_check_branch
        %789 = sbr.rel (%p787) target = $region40
      $region39: #{conv_block_param_forward.1} parent=31 // pred_region
        _
      $region40: #{conv_block_param_forward.1} parent=31 // pred_fallthru
        _
    $region32: #{conv_block_param_forward.1} parent=5 // pred_fallthru
      _
    %p790 = scmp.le.s32.totalorder 2, %s11
    // Predicated region
    $region41: #{conv_block_param_forward.1} parent=5 // pred_check
      %p791 = pneg %p790
    $region42: #{conv_block_param_forward.1} parent=5 // pred_check_branch
      %793 = sbr.rel (%p791) target = $region44
    $region43: #{conv_block_param_forward.1} parent=5 // pred_region
      %s794 = ssub.s32 %s11, 2
      // Predicated region
      $region45: #{conv_block_param_forward.1} parent=43 // pred_check
        %p795 = pneg %p108
      $region46: #{conv_block_param_forward.1} parent=43 // pred_check_branch
        %797 = sbr.rel (%p795) target = $region48
      $region47: #{conv_block_param_forward.1} parent=43 // pred_region
        %s798 = smul.u32 26, %s17
        %p799 = scmp.lt.s32.totalorder %s798, 51
        %s800 = scalar_select %p799, %s798, 51
        %s801 = smul.addr %s800, 4
        %s802 = scalar_lea.vmem %s3, %s801
      $region48: #{conv_block_param_forward.1} parent=43 // pred_fallthru
        _
      // Predicated region
      $region49: #{conv_block_param_forward.1} parent=43 // pred_check
        %p803 = pneg %p134
      $region50: #{conv_block_param_forward.1} parent=43 // pred_check_branch
        %805 = sbr.rel (%p803) target = $region52
      $region51: #{conv_block_param_forward.1} parent=43 // pred_region
        %p806 = scmp.lt.s32.totalorder %s17, 1
        %s807 = scalar_select %p806, %s17, 1
        %s808 = smul.addr %s807, 2
        %s809 = scalar_lea.vmem %s4, %s808
      $region52: #{conv_block_param_forward.1} parent=43 // pred_fallthru
        _
    $region44: #{conv_block_param_forward.1} parent=5 // pred_fallthru
      _
  $region6: #{conv_block_param_forward.1} parent=0 // loop_footer
    %s15 = sadd.s32 1, %s11
  $region7: #{conv_block_param_forward.1} parent=0 // loop_footer_branch
    %10 = sbr.rel target = $region3
  $region8: #{conv_block_param_forward.1} parent=0 // loop_exit
    _

</llo_original>
